<compile_context>
chip_gen: v5e
topology: v5e:2x2
jax: 0.10.0
libtpu: 0.0.40
codegen_flags: <defaults>
</compile_context>

<pallas_src>
import jax
import jax.numpy as jnp
from jax.experimental import pallas as pl
from jax.experimental.pallas import tpu as pltpu


def _round_up(x, m):
    return ((x + m - 1) // m) * m


def mlp_kernel(x_ref, w1_ref, b1_ref, w2_ref, b2_ref, o_ref):
    # Layer 1: x @ W1 + b1, ReLU  (MXU matmul, f32 accumulation; bias/ReLU on VPU)
    h = jnp.dot(x_ref[...], w1_ref[...], preferred_element_type=jnp.float32)
    h = jnp.maximum(h + b1_ref[...], 0.0)
    # Layer 2: h @ W2 + b2 (h stays in VMEM/vregs; never written to HBM)
    out = jnp.dot(h.astype(w2_ref.dtype), w2_ref[...],
                  preferred_element_type=jnp.float32)
    out = out + b2_ref[...]
    o_ref[...] = out.astype(o_ref.dtype)


def mlp_forward(x, w1, b1, w2, b2, *, tm=None):
    N, nfeat = x.shape
    nhid = w1.shape[1]
    nclass = w2.shape[1]
    dtype = x.dtype

    # Lane-pad feature dims to multiples of 128 for lane-dense MXU / stores.
    nfeat_p = _round_up(nfeat, 128)
    nhid_p = _round_up(nhid, 128)
    nclass_p = _round_up(nclass, 128)

    # Row tile: largest up to 512, multiple of 8 sublanes. Pad N up to a
    # multiple of TM so every grid step sees a full block (padded rows are
    # zeros and sliced off at the end).
    if tm is None:
        tm = min(512, _round_up(N, 8))
    tm = _round_up(tm, 8)
    N_p = _round_up(N, tm)

    # Zero-pad (zeros in padded features/rows do not perturb the valid region:
    # padded W1 rows/cols are zero, padded b1 entries are zero -> padded hidden
    # columns are relu(0)=0 and contribute nothing through the zero rows of W2).
    x_p = jnp.zeros((N_p, nfeat_p), dtype).at[:N, :nfeat].set(x)
    w1_p = jnp.zeros((nfeat_p, nhid_p), w1.dtype).at[:nfeat, :nhid].set(w1)
    b1_p = jnp.zeros((1, nhid_p), b1.dtype).at[:, :nhid].set(b1.reshape(1, nhid))
    w2_p = jnp.zeros((nhid_p, nclass_p), w2.dtype).at[:nhid, :nclass].set(w2)
    b2_p = jnp.zeros((1, nclass_p), b2.dtype).at[:, :nclass].set(b2.reshape(1, nclass))

    grid = (N_p // tm,)

    # VMEM budget: double-buffered streaming x/out tiles + resident weights
    # (also double-buffered by the pipeline) + f32 hidden intermediate.
    dt_bytes = jnp.dtype(dtype).itemsize
    vmem_est = (
        2 * tm * nfeat_p * dt_bytes            # x tiles (double buffered)
        + 2 * tm * nclass_p * dt_bytes         # out tiles (double buffered)
        + 2 * (nfeat_p * nhid_p + nhid_p * nclass_p + nhid_p + nclass_p) * dt_bytes
        + tm * nhid_p * 4                      # f32 hidden activation
    )
    vmem_limit = min(max(int(vmem_est * 2) + (2 << 20), 16 << 20), 100 << 20)

    cost = pl.CostEstimate(
        flops=2 * N_p * nfeat_p * nhid_p + 2 * N_p * nhid_p * nclass_p,
        transcendentals=0,
        bytes_accessed=(N_p * nfeat_p + nfeat_p * nhid_p + nhid_p * nclass_p
                        + nhid_p + nclass_p + N_p * nclass_p) * dt_bytes,
    )

    out_p = pl.pallas_call(
        mlp_kernel,
        out_shape=jax.ShapeDtypeStruct((N_p, nclass_p), dtype),
        grid_spec=pl.GridSpec(
            grid=grid,
            in_specs=[
                pl.BlockSpec((tm, nfeat_p), lambda i: (i, 0)),       # streams
                pl.BlockSpec((nfeat_p, nhid_p), lambda i: (0, 0)),   # resident
                pl.BlockSpec((1, nhid_p), lambda i: (0, 0)),         # resident
                pl.BlockSpec((nhid_p, nclass_p), lambda i: (0, 0)),  # resident
                pl.BlockSpec((1, nclass_p), lambda i: (0, 0)),       # resident
            ],
            out_specs=pl.BlockSpec((tm, nclass_p), lambda i: (i, 0)),
        ),
        compiler_params=pltpu.CompilerParams(
            dimension_semantics=("parallel",),   # shard rows across TCs on v7x
            vmem_limit_bytes=vmem_limit,
        ),
        cost_estimate=cost,
    )(x_p, w1_p, b1_p, w2_p, b2_p)

    return out_p[:N, :nclass]


def init_params(key, nfeat, nhid, nclass, dtype=jnp.float32):
    # pygcn MLPLayer.reset_parameters: uniform(-stdv, stdv), stdv = 1/sqrt(out_features)
    k1, k2, k3, k4 = jax.random.split(key, 4)
    stdv1 = 1.0 / (nhid ** 0.5)
    stdv2 = 1.0 / (nclass ** 0.5)
    w1 = jax.random.uniform(k1, (nfeat, nhid), dtype, -stdv1, stdv1)
    b1 = jax.random.uniform(k2, (1, nhid), dtype, -stdv1, stdv1)
    w2 = jax.random.uniform(k3, (nhid, nclass), dtype, -stdv2, stdv2)
    b2 = jax.random.uniform(k4, (1, nclass), dtype, -stdv2, stdv2)
    return w1, b1, w2, b2


if __name__ == "__main__":
    key = jax.random.PRNGKey(0)
    kx, kp = jax.random.split(key)

    # Small but tiling-exercising sizes: 4 row tiles of 128, unaligned
    # hidden/class dims that get lane-padded to 128 inside the wrapper.
    N, nfeat, nhid, nclass = 512, 128, 64, 16
    x = jax.random.normal(kx, (N, nfeat), dtype=jnp.float32)
    w1, b1, w2, b2 = init_params(kp, nfeat, nhid, nclass)

    out = mlp_forward(x, w1, b1, w2, b2, tm=128)
    out = jax.block_until_ready(out)

    # Reference check in plain JAX.
    ref = jnp.maximum(x @ w1 + b1, 0.0) @ w2 + b2
    assert out.shape == (N, nclass)
    assert jnp.allclose(out, ref, atol=1e-4, rtol=1e-4)

    print("KERNEL_OK")
</pallas_src>

<mosaic_0001>
module attributes {stable_mosaic.version = 11 : i64} {
  func.func @mlp_kernel(%arg0: i32, %arg1: memref<128x128xf32, #tpu.memory_space<vmem>>, %arg2: memref<128x128xf32, #tpu.memory_space<vmem>>, %arg3: memref<1x128xf32, #tpu.memory_space<vmem>>, %arg4: memref<128x128xf32, #tpu.memory_space<vmem>>, %arg5: memref<1x128xf32, #tpu.memory_space<vmem>>, %arg6: memref<128x128xf32, #tpu.memory_space<vmem>>) attributes {dimension_semantics = [#tpu.dimension_semantics<parallel>], iteration_bounds = array<i64: 4>, scalar_prefetch = 0 : i64, scratch_operands = 0 : i64, tpu.core_type = #tpu.core_type<tc>, window_params = [{transform_indices = @transform_0, window_bounds = array<i64: 128, 128>}, {pipeline_mode = #tpu.pipeline_mode<synchronous>, transform_indices = @transform_1, window_bounds = array<i64: 128, 128>}, {pipeline_mode = #tpu.pipeline_mode<synchronous>, transform_indices = @transform_2, window_bounds = array<i64: 1, 128>}, {pipeline_mode = #tpu.pipeline_mode<synchronous>, transform_indices = @transform_3, window_bounds = array<i64: 128, 128>}, {pipeline_mode = #tpu.pipeline_mode<synchronous>, transform_indices = @transform_4, window_bounds = array<i64: 1, 128>}, {transform_indices = @transform_5, window_bounds = array<i64: 128, 128>}]} {
    %c0 = arith.constant 0 : index
    %c0_0 = arith.constant 0 : index
    %0 = vector.load %arg1[%c0, %c0_0] : memref<128x128xf32, #tpu.memory_space<vmem>>, vector<128x128xf32>
    %c0_1 = arith.constant 0 : index
    %c0_2 = arith.constant 0 : index
    %1 = vector.load %arg2[%c0_1, %c0_2] : memref<128x128xf32, #tpu.memory_space<vmem>>, vector<128x128xf32>
    %cst = arith.constant dense<0.000000e+00> : vector<128x128xf32>
    %2 = tpu.matmul %0, %1, %cst {dimension_numbers = #tpu.dot_dimension_numbers<[1], [0], [0], [1], [0, 0, 1, 1], [], []>} : vector<128x128xf32>, vector<128x128xf32>, vector<128x128xf32> -> vector<128x128xf32>
    %c0_3 = arith.constant 0 : index
    %c0_4 = arith.constant 0 : index
    %3 = vector.load %arg3[%c0_3, %c0_4] : memref<1x128xf32, #tpu.memory_space<vmem>>, vector<1x128xf32>
    %4 = vector.broadcast %3 : vector<1x128xf32> to vector<128x128xf32>
    %5 = arith.addf %2, %4 : vector<128x128xf32>
    %cst_5 = arith.constant 0.000000e+00 : f32
    %6 = vector.broadcast %cst_5 : f32 to vector<128x128xf32>
    %7 = arith.maximumf %5, %6 : vector<128x128xf32>
    %c0_6 = arith.constant 0 : index
    %c0_7 = arith.constant 0 : index
    %8 = vector.load %arg4[%c0_6, %c0_7] : memref<128x128xf32, #tpu.memory_space<vmem>>, vector<128x128xf32>
    %cst_8 = arith.constant dense<0.000000e+00> : vector<128x128xf32>
    %9 = tpu.matmul %7, %8, %cst_8 {dimension_numbers = #tpu.dot_dimension_numbers<[1], [0], [0], [1], [0, 0, 1, 1], [], []>} : vector<128x128xf32>, vector<128x128xf32>, vector<128x128xf32> -> vector<128x128xf32>
    %c0_9 = arith.constant 0 : index
    %c0_10 = arith.constant 0 : index
    %10 = vector.load %arg5[%c0_9, %c0_10] : memref<1x128xf32, #tpu.memory_space<vmem>>, vector<1x128xf32>
    %11 = vector.broadcast %10 : vector<1x128xf32> to vector<128x128xf32>
    %12 = arith.addf %9, %11 : vector<128x128xf32>
    %c0_11 = arith.constant 0 : index
    %c0_12 = arith.constant 0 : index
    %13 = vector.load %arg6[%c0_11, %c0_12] : memref<128x128xf32, #tpu.memory_space<vmem>>, vector<128x128xf32>
    tpu.vector_store %arg6[%c0_11, %c0_12], %12 {strides = array<i32>} : memref<128x128xf32, #tpu.memory_space<vmem>>, vector<128x128xf32>,
    return
  }
  func.func @transform_0(%arg0: i32) -> (i32, i32) {
    %c0_i32 = arith.constant 0 : i32
    %c0_i32_0 = arith.constant 0 : i32
    return %arg0, %c0_i32 : i32, i32
  }
  func.func @transform_1(%arg0: i32) -> (i32, i32) {
    %c0_i32 = arith.constant 0 : i32
    %c0_i32_0 = arith.constant 0 : i32
    %c0_i32_1 = arith.constant 0 : i32
    return %c0_i32, %c0_i32_0 : i32, i32
  }
  func.func @transform_2(%arg0: i32) -> (i32, i32) {
    %c0_i32 = arith.constant 0 : i32
    %c0_i32_0 = arith.constant 0 : i32
    %c0_i32_1 = arith.constant 0 : i32
    return %c0_i32, %c0_i32_0 : i32, i32
  }
  func.func @transform_3(%arg0: i32) -> (i32, i32) {
    %c0_i32 = arith.constant 0 : i32
    %c0_i32_0 = arith.constant 0 : i32
    %c0_i32_1 = arith.constant 0 : i32
    return %c0_i32, %c0_i32_0 : i32, i32
  }
  func.func @transform_4(%arg0: i32) -> (i32, i32) {
    %c0_i32 = arith.constant 0 : i32
    %c0_i32_0 = arith.constant 0 : i32
    %c0_i32_1 = arith.constant 0 : i32
    return %c0_i32, %c0_i32_0 : i32, i32
  }
  func.func @transform_5(%arg0: i32) -> (i32, i32) {
    %c0_i32 = arith.constant 0 : i32
    %c0_i32_0 = arith.constant 0 : i32
    return %arg0, %c0_i32 : i32, i32
  }
}

</mosaic_0001>

<llo_original>
// kernel: tpu_custom_call.1
$region0: #{tpu_custom_call.1}
  #allocation0 [shape = 'u32[]', space=smem, size = 0x4, offset = 0x4, fixed_abs, tag = 'smem constant byte address 0x4 - core index']
  #allocation1 [shape = 'u32[72,128]{1,0:T(1,128)}', space=vmem, size = 0x9000, scoped, tag = 'internal scratch']
  %s0 = inlined_call_operand.hbm [shape: f32[512,128], index: 0, kind: input, shape index: {}]
  %s1 = inlined_call_operand.hbm [shape: f32[128,128], index: 1, kind: input, shape index: {}]
  %s2 = inlined_call_operand.vmem [shape: f32[1,128], index: 2, kind: input, shape index: {}]
  %s3 = inlined_call_operand.hbm [shape: f32[128,128], index: 3, kind: input, shape index: {}]
  %s4 = inlined_call_operand.vmem [shape: f32[1,128], index: 4, kind: input, shape index: {}]
  %s5 = inlined_call_operand.hbm [shape: f32[512,128], index: 5, kind: output, shape index: {}]
  %s6 = sld [smem:[#allocation0]]
  $region65: #{tpu_custom_call.1} parent=0
    _
  %s8 = ssub.s32 1, %s6
  %s9 = scalar_select 0, %s8, %s6
  $region1: #{tpu_custom_call.1} parent=0
    #allocation2 [shape = 'u8[131072]{0}', space=vmem, size = 0x20000, scoped, tag = 'input window, operand 0']
    #allocation3 [shape = 's32[2]{0}', space=sflag, size = 0x8, scoped, tag = 'scoped memory for tpu_custom_call.1']
    #allocation4 [shape = 's32[2]{0}', space=sflag, size = 0x8, scoped, tag = 'scoped memory for tpu_custom_call.1']
    #allocation5 [shape = 'u8[65536]{0}', space=vmem, size = 0x10000, scoped, tag = 'input window, operand 1, single buffered']
    #allocation6 [shape = 's32[1]{0}', space=sflag, size = 0x4, scoped, tag = 'scoped memory for tpu_custom_call.1']
    #allocation7 [shape = 'u8[65536]{0}', space=vmem, size = 0x10000, scoped, tag = 'input window, operand 3, single buffered']
    #allocation8 [shape = 'u8[131072]{0}', space=vmem, size = 0x20000, scoped, tag = 'output window, operand 0']
    %10 = vsyncpa [#allocation3], 0
    %s11 = scalar_lea.sflag [#allocation3], 1
    %12 = vsyncpa %s11, 0
    %13 = vsyncpa [#allocation6], 0
    %14 = vsyncpa [#allocation4], 0
    %s15 = scalar_lea.sflag [#allocation4], 1
    %16 = vsyncpa %s15, 0
    loop: start=0, step=1, limit=6
    $region2: #{tpu_custom_call.1} parent=1 // loop_pre_header
      _
    $region3: #{tpu_custom_call.1} parent=1 // loop_header
      %s18 = sphi 0, %s22
      %p19 = scmp.ge.s32.totalorder %s18, 6
      %s28 = sphi 0, %s30
      %s31 = sphi 0, %s28
      %s32 = sphi 0, %s31
      %s48 = sphi 0, %s32
      %s52 = sphi 0, %s52
      %s54 = sphi 0, %s52
      %s55 = sphi 0, %s54
      %s69 = sphi 0, %s55
      %s73 = sphi 0, %s73
      %s75 = sphi 0, %s73
      %s76 = sphi 0, %s75
      %s90 = sphi 0, %s76
      %s94 = sphi 0, %s94
      %s96 = sphi 0, %s94
      %s97 = sphi 0, %s96
      %s111 = sphi 0, %s97
      %s115 = sphi 0, %s115
      %s117 = sphi 0, %s115
      %s118 = sphi 0, %s117
      %s132 = sphi 0, %s118
      %s138 = sphi 0, %s140
      %s141 = sphi 0, %s138
      %s142 = sphi 0, %s141
      %s158 = sphi 0, %s142
    $region4: #{tpu_custom_call.1} parent=1 // loop_header_branch
      %21 = sbr.rel (%p19) target = $region8
    $region5: #{tpu_custom_call.1} parent=1 // loop_body
      %s23 = ssub.s32 %s18, 1
      %s24 = ssub.s32 %s18, 2
      %s25 = sadd.s32 %s18, 1
      %s26 = ssub.s32 %s18, %s25
      %p27 = scmp.eq.s32.totalorder %s26, 0
      %s29 = sadd.s32 %s28, 1
      %s30 = scalar_select %p27, %s28, %s29
      %p33 = pneg %p27
      %p34 = scmp.eq.s32.totalorder %s18, 3
      %p35 = por %p33, %p34
      %p36 = scmp.ne.s32.totalorder %s28, %s31
      %p37 = scmp.eq.s32.totalorder %s18, 0
      %p38 = por %p36, %p37
      %p39 = scmp.ne.s32.totalorder %s28, %s31
      %p40 = scmp.eq.s32.totalorder %s23, 3
      %p41 = por %p39, %p40
      %p42 = scmp.ne.s32.totalorder %s31, %s32
      %p43 = scmp.eq.s32.totalorder %s23, 0
      %p44 = por %p42, %p43
      %p45 = scmp.ne.s32.totalorder %s31, %s32
      %p46 = scmp.eq.s32.totalorder %s24, 3
      %p47 = por %p45, %p46
      %p49 = scmp.ne.s32.totalorder %s32, %s48
      %p50 = scmp.eq.s32.totalorder %s24, 0
      %p51 = por %p49, %p50
      %s53 = sadd.s32 %s52, 1
      %p56 = scmp.eq.s32.totalorder %s18, 3
      %p57 = scmp.ne.s32.totalorder %s52, %s54
      %p58 = scmp.eq.s32.totalorder %s18, 0
      %p59 = por %p57, %p58
      %p60 = scmp.ne.s32.totalorder %s52, %s54
      %p61 = scmp.eq.s32.totalorder %s23, 3
      %p62 = por %p60, %p61
      %p63 = scmp.ne.s32.totalorder %s54, %s55
      %p64 = scmp.eq.s32.totalorder %s23, 0
      %p65 = por %p63, %p64
      %p66 = scmp.ne.s32.totalorder %s54, %s55
      %p67 = scmp.eq.s32.totalorder %s24, 3
      %p68 = por %p66, %p67
      %p70 = scmp.ne.s32.totalorder %s55, %s69
      %p71 = scmp.eq.s32.totalorder %s24, 0
      %p72 = por %p70, %p71
      %s74 = sadd.s32 %s73, 1
      %p77 = scmp.eq.s32.totalorder %s18, 3
      %p78 = scmp.ne.s32.totalorder %s73, %s75
      %p79 = scmp.eq.s32.totalorder %s18, 0
      %p80 = por %p78, %p79
      %p81 = scmp.ne.s32.totalorder %s73, %s75
      %p82 = scmp.eq.s32.totalorder %s23, 3
      %p83 = por %p81, %p82
      %p84 = scmp.ne.s32.totalorder %s75, %s76
      %p85 = scmp.eq.s32.totalorder %s23, 0
      %p86 = por %p84, %p85
      %p87 = scmp.ne.s32.totalorder %s75, %s76
      %p88 = scmp.eq.s32.totalorder %s24, 3
      %p89 = por %p87, %p88
      %p91 = scmp.ne.s32.totalorder %s76, %s90
      %p92 = scmp.eq.s32.totalorder %s24, 0
      %p93 = por %p91, %p92
      %s95 = sadd.s32 %s94, 1
      %p98 = scmp.eq.s32.totalorder %s18, 3
      %p99 = scmp.ne.s32.totalorder %s94, %s96
      %p100 = scmp.eq.s32.totalorder %s18, 0
      %p101 = por %p99, %p100
      %p102 = scmp.ne.s32.totalorder %s94, %s96
      %p103 = scmp.eq.s32.totalorder %s23, 3
      %p104 = por %p102, %p103
      %p105 = scmp.ne.s32.totalorder %s96, %s97
      %p106 = scmp.eq.s32.totalorder %s23, 0
      %p107 = por %p105, %p106
      %p108 = scmp.ne.s32.totalorder %s96, %s97
      %p109 = scmp.eq.s32.totalorder %s24, 3
      %p110 = por %p108, %p109
      %p112 = scmp.ne.s32.totalorder %s97, %s111
      %p113 = scmp.eq.s32.totalorder %s24, 0
      %p114 = por %p112, %p113
      %s116 = sadd.s32 %s115, 1
      %p119 = scmp.eq.s32.totalorder %s18, 3
      %p120 = scmp.ne.s32.totalorder %s115, %s117
      %p121 = scmp.eq.s32.totalorder %s18, 0
      %p122 = por %p120, %p121
      %p123 = scmp.ne.s32.totalorder %s115, %s117
      %p124 = scmp.eq.s32.totalorder %s23, 3
      %p125 = por %p123, %p124
      %p126 = scmp.ne.s32.totalorder %s117, %s118
      %p127 = scmp.eq.s32.totalorder %s23, 0
      %p128 = por %p126, %p127
      %p129 = scmp.ne.s32.totalorder %s117, %s118
      %p130 = scmp.eq.s32.totalorder %s24, 3
      %p131 = por %p129, %p130
      %p133 = scmp.ne.s32.totalorder %s118, %s132
      %p134 = scmp.eq.s32.totalorder %s24, 0
      %p135 = por %p133, %p134
      %s136 = ssub.s32 %s18, %s25
      %p137 = scmp.eq.s32.totalorder %s136, 0
      %s139 = sadd.s32 %s138, 1
      %s140 = scalar_select %p137, %s138, %s139
      %p143 = pneg %p137
      %p144 = scmp.eq.s32.totalorder %s18, 3
      %p145 = por %p143, %p144
      %p146 = scmp.ne.s32.totalorder %s138, %s141
      %p147 = scmp.eq.s32.totalorder %s18, 0
      %p148 = por %p146, %p147
      %p149 = scmp.ne.s32.totalorder %s138, %s141
      %p150 = scmp.eq.s32.totalorder %s23, 3
      %p151 = por %p149, %p150
      %p152 = scmp.ne.s32.totalorder %s141, %s142
      %p153 = scmp.eq.s32.totalorder %s23, 0
      %p154 = por %p152, %p153
      %p155 = scmp.ne.s32.totalorder %s141, %s142
      %p156 = scmp.eq.s32.totalorder %s24, 3
      %p157 = por %p155, %p156
      %p159 = scmp.ne.s32.totalorder %s142, %s158
      %p160 = scmp.eq.s32.totalorder %s24, 0
      %p161 = por %p159, %p160
      %p162 = scmp.le.s32.totalorder 1, %s18
      %p163 = scmp.lt.s32.totalorder %s18, 5
      %p164 = pnand %p162, %p163
      %p165 = pneg %p164
      // Predicated region
      $region9: #{tpu_custom_call.1} parent=5 // pred_check
        _
      $region10: #{tpu_custom_call.1} parent=5 // pred_check_branch
        %167 = sbr.rel (%p164) target = $region12
      $region11: #{tpu_custom_call.1} parent=5 // pred_region
        %s168 = ssub.s32 %s18, 1
        // Predicated region
        $region13: #{tpu_custom_call.1} parent=11 // pred_check
          %p169 = pneg %p65
        $region14: #{tpu_custom_call.1} parent=11 // pred_check_branch
          %171 = sbr.rel (%p169) target = $region16
        $region15: #{tpu_custom_call.1} parent=11 // pred_region
          %173 = vsyncadd [#allocation6], 0
          %s174 = sshll.u32 %s1, 4
          %s175 = int_to_ptr.hbm [resolvable:$true] %s174
          %s176 = sshll.u32 [#allocation5], 4
          %s177 = int_to_ptr.vmem [resolvable:$true] %s176
          %182 = dma.hbm_to_vmem [thread:$0]  %s175, 2048, %s177, [#allocation6], 128, 128, 8
        $region16: #{tpu_custom_call.1} parent=11 // pred_fallthru
          _
        // Predicated region
        $region17: #{tpu_custom_call.1} parent=11 // pred_check
          %p183 = pneg %p86
        $region18: #{tpu_custom_call.1} parent=11 // pred_check_branch
          %185 = sbr.rel (%p183) target = $region20
        $region19: #{tpu_custom_call.1} parent=11 // pred_region
          _
        $region20: #{tpu_custom_call.1} parent=11 // pred_fallthru
          _
        // Predicated region
        $region21: #{tpu_custom_call.1} parent=11 // pred_check
          %p186 = pneg %p107
        $region22: #{tpu_custom_call.1} parent=11 // pred_check_branch
          %188 = sbr.rel (%p186) target = $region24
        $region23: #{tpu_custom_call.1} parent=11 // pred_region
          %190 = vsyncadd [#allocation6], 0
          %s191 = sshll.u32 %s3, 4
          %s192 = int_to_ptr.hbm [resolvable:$true] %s191
          %s193 = sshll.u32 [#allocation7], 4
          %s194 = int_to_ptr.vmem [resolvable:$true] %s193
          %199 = dma.hbm_to_vmem [thread:$0]  %s192, 2048, %s194, [#allocation6], 128, 128, 8
        $region24: #{tpu_custom_call.1} parent=11 // pred_fallthru
          _
        // Predicated region
        $region25: #{tpu_custom_call.1} parent=11 // pred_check
          %p200 = pneg %p128
        $region26: #{tpu_custom_call.1} parent=11 // pred_check_branch
          %202 = sbr.rel (%p200) target = $region28
        $region27: #{tpu_custom_call.1} parent=11 // pred_region
          _
        $region28: #{tpu_custom_call.1} parent=11 // pred_fallthru
          _
      $region12: #{tpu_custom_call.1} parent=5 // pred_fallthru
        _
      %p203 = scmp.lt.s32.totalorder %s18, 4
      // Predicated region
      $region29: #{tpu_custom_call.1} parent=5 // pred_check
        %p204 = pneg %p203
      $region30: #{tpu_custom_call.1} parent=5 // pred_check_branch
        %206 = sbr.rel (%p204) target = $region32
      $region31: #{tpu_custom_call.1} parent=5 // pred_region
        // Predicated region
        $region33: #{tpu_custom_call.1} parent=31 // pred_check
          %p207 = pneg %p38
        $region34: #{tpu_custom_call.1} parent=31 // pred_check_branch
          %209 = sbr.rel (%p207) target = $region36
        $region35: #{tpu_custom_call.1} parent=31 // pred_region
          %s210 = sand.u32 %s28, 1
          %s211 = scalar_lea.sflag [#allocation3], %s210
          %s212 = sand.u32 %s28, 1
          %s213 = smul.addr %s212, 128
          %s214 = scalar_lea.vmem [#allocation2], %s213
          %s215 = smul.u32 16, %s18
          %217 = vsyncadd %s211, 0
          %s218 = smul.addr %s215, 8
          %s219 = scalar_lea.hbm %s0, %s218
          %s220 = sshll.u32 %s219, 4
          %s221 = int_to_ptr.hbm [resolvable:$true] %s220
          %s222 = sshll.u32 %s214, 4
          %s223 = int_to_ptr.vmem [resolvable:$true] %s222
          %228 = dma.hbm_to_vmem [thread:$0]  %s221, 2048, %s223, %s211, 128, 128, 8
        $region36: #{tpu_custom_call.1} parent=31 // pred_fallthru
          _
      $region32: #{tpu_custom_call.1} parent=5 // pred_fallthru
        _
      %p229 = scmp.le.s32.totalorder 1, %s18
      %p230 = scmp.lt.s32.totalorder %s18, 5
      %p231 = pnand %p229, %p230
      %p232 = pneg %p231
      // Predicated region
      $region37: #{tpu_custom_call.1} parent=5 // pred_check
        _
      $region38: #{tpu_custom_call.1} parent=5 // pred_check_branch
        %234 = sbr.rel (%p231) target = $region40
      $region39: #{tpu_custom_call.1} parent=5 // pred_region
        %s235 = ssub.s32 %s18, 1
        %s236 = sand.u32 %s31, 1
        %s237 = scalar_lea.sflag [#allocation3], %s236
        %s238 = sand.u32 %s31, 1
        %s239 = smul.addr %s238, 128
        %s240 = scalar_lea.vmem [#allocation2], %s239
        // Predicated region
        $region41: #{tpu_custom_call.1} parent=39 // pred_check
          %p241 = pneg %p44
        $region42: #{tpu_custom_call.1} parent=39 // pred_check_branch
          %243 = sbr.rel (%p241) target = $region44
        $region43: #{tpu_custom_call.1} parent=39 // pred_region
          %245 = dma.done %s237, 2048
        $region44: #{tpu_custom_call.1} parent=39 // pred_fallthru
          _
        // Predicated region
        $region45: #{tpu_custom_call.1} parent=39 // pred_check
          %p246 = pneg %p65
        $region46: #{tpu_custom_call.1} parent=39 // pred_check_branch
          %248 = sbr.rel (%p246) target = $region48
        $region47: #{tpu_custom_call.1} parent=39 // pred_region
          %250 = dma.done [#allocation6], 2048
        $region48: #{tpu_custom_call.1} parent=39 // pred_fallthru
          _
        // Predicated region
        $region49: #{tpu_custom_call.1} parent=39 // pred_check
          %p251 = pneg %p107
        $region50: #{tpu_custom_call.1} parent=39 // pred_check_branch
          %253 = sbr.rel (%p251) target = $region52
        $region51: #{tpu_custom_call.1} parent=39 // pred_region
          %255 = dma.done [#allocation6], 2048
        $region52: #{tpu_custom_call.1} parent=39 // pred_fallthru
          _
        %s256 = sand.u32 %s31, 1
        %s257 = scalar_lea.sflag [#allocation3], %s256
        %s258 = sand.u32 %s31, 1
        %s259 = smul.addr %s258, 128
        %s260 = scalar_lea.vmem [#allocation2], %s259
        %p261 = pneg %p44
        %p262 = pneg %p41
        %p263 = pneg %p65
        %p264 = pneg %p62
        %p265 = pneg %p86
        %p266 = pneg %p83
        %p267 = pneg %p107
        %p268 = pneg %p104
        %p269 = pneg %p128
        %p270 = pneg %p125
        %p271 = pneg %p154
        %p272 = pneg %p151
        %s273 = sand.u32 %s141, 1
        %s274 = scalar_lea.sflag [#allocation4], %s273
        %s275 = sand.u32 %s141, 1
        %s276 = smul.addr %s275, 128
        %s277 = scalar_lea.vmem [#allocation8], %s276
        %s278 = smul.u32 16, %s23
        %s279 = smul.u32 16, %s23
        %v280 = vld [vmem:[%s240] sm:$0xff]
        %v281 = vld [vmem:[%s240 + $0x8] sm:$0xff]
        %v282 = vld [vmem:[%s240 + $0x10] sm:$0xff]
        %v283 = vld [vmem:[%s240 + $0x18] sm:$0xff]
        %v284 = vld [vmem:[%s240 + $0x20] sm:$0xff]
        %v285 = vld [vmem:[%s240 + $0x28] sm:$0xff]
        %v286 = vld [vmem:[%s240 + $0x30] sm:$0xff]
        %v287 = vld [vmem:[%s240 + $0x38] sm:$0xff]
        %v288 = vld [vmem:[%s240 + $0x40] sm:$0xff]
        %v289 = vld [vmem:[%s240 + $0x48] sm:$0xff]
        %v290 = vld [vmem:[%s240 + $0x50] sm:$0xff]
        %v291 = vld [vmem:[%s240 + $0x58] sm:$0xff]
        %v292 = vld [vmem:[%s240 + $0x60] sm:$0xff]
        %v293 = vld [vmem:[%s240 + $0x68] sm:$0xff]
        %v294 = vld [vmem:[%s240 + $0x70] sm:$0xff]
        %v295 = vld [vmem:[%s240 + $0x78] sm:$0xff]
        %v296 = vld [vmem:[#allocation5] sm:$0xff]
        %v297 = vld [vmem:[#allocation5 + $0x8] sm:$0xff]
        %v298 = vld [vmem:[#allocation5 + $0x10] sm:$0xff]
        %v299 = vld [vmem:[#allocation5 + $0x18] sm:$0xff]
        %v300 = vld [vmem:[#allocation5 + $0x20] sm:$0xff]
        %v301 = vld [vmem:[#allocation5 + $0x28] sm:$0xff]
        %v302 = vld [vmem:[#allocation5 + $0x30] sm:$0xff]
        %v303 = vld [vmem:[#allocation5 + $0x38] sm:$0xff]
        %v304 = vld [vmem:[#allocation5 + $0x40] sm:$0xff]
        %v305 = vld [vmem:[#allocation5 + $0x48] sm:$0xff]
        %v306 = vld [vmem:[#allocation5 + $0x50] sm:$0xff]
        %v307 = vld [vmem:[#allocation5 + $0x58] sm:$0xff]
        %v308 = vld [vmem:[#allocation5 + $0x60] sm:$0xff]
        %v309 = vld [vmem:[#allocation5 + $0x68] sm:$0xff]
        %v310 = vld [vmem:[#allocation5 + $0x70] sm:$0xff]
        %v311 = vld [vmem:[#allocation5 + $0x78] sm:$0xff]
        %v312 = vld [vmem:[%s2] sm:$0x1]
        %v314 = vperm.slane %v312, 0
        %316 = vmatpush.msra.mxu0 %v311
        %317 = vmatpush.msra.mxu0 %v310
        %318 = vmatpush.msra.mxu0 %v309
        %319 = vmatpush.msra.mxu0 %v308
        %320 = vmatpush.msra.mxu0 %v307
        %321 = vmatpush.msra.mxu0 %v306
        %322 = vmatpush.msra.mxu0 %v305
        %323 = vmatpush.msra.mxu0 %v304
        %324 = vmatpush.msra.mxu0 %v303
        %325 = vmatpush.msra.mxu0 %v302
        %326 = vmatpush.msra.mxu0 %v301
        %327 = vmatpush.msra.mxu0 %v300
        %328 = vmatpush.msra.mxu0 %v299
        %329 = vmatpush.msra.mxu0 %v298
        %330 = vmatpush.msra.mxu0 %v297
        %331 = vmatpush.msra.mxu0 %v296
        %332 = vmatmul.f32.gmra.mxu0 %v280
        %v333 = vpop.f32.mrf.mxu0
        %v334 = vadd.f32 %v314, %v333
        %335 = vmatmul.f32.gmra.mxu0 %v281
        %v336 = vpop.f32.mrf.mxu0
        %v337 = vadd.f32 %v314, %v336
        %338 = vmatmul.f32.gmra.mxu0 %v282
        %v339 = vpop.f32.mrf.mxu0
        %v340 = vadd.f32 %v314, %v339
        %341 = vmatmul.f32.gmra.mxu0 %v283
        %v342 = vpop.f32.mrf.mxu0
        %v343 = vadd.f32 %v314, %v342
        %344 = vmatmul.f32.gmra.mxu0 %v284
        %v345 = vpop.f32.mrf.mxu0
        %v346 = vadd.f32 %v314, %v345
        %347 = vmatmul.f32.gmra.mxu0 %v285
        %v348 = vpop.f32.mrf.mxu0
        %v349 = vadd.f32 %v314, %v348
        %350 = vmatmul.f32.gmra.mxu0 %v286
        %v351 = vpop.f32.mrf.mxu0
        %v352 = vadd.f32 %v314, %v351
        %353 = vmatmul.f32.gmra.mxu0 %v287
        %v354 = vpop.f32.mrf.mxu0
        %v355 = vadd.f32 %v314, %v354
        %356 = vmatmul.f32.gmra.mxu0 %v288
        %v357 = vpop.f32.mrf.mxu0
        %v358 = vadd.f32 %v314, %v357
        %359 = vmatmul.f32.gmra.mxu0 %v289
        %v360 = vpop.f32.mrf.mxu0
        %v361 = vadd.f32 %v314, %v360
        %362 = vmatmul.f32.gmra.mxu0 %v290
        %v363 = vpop.f32.mrf.mxu0
        %v364 = vadd.f32 %v314, %v363
        %365 = vmatmul.f32.gmra.mxu0 %v291
        %v366 = vpop.f32.mrf.mxu0
        %v367 = vadd.f32 %v314, %v366
        %368 = vmatmul.f32.gmra.mxu0 %v292
        %v369 = vpop.f32.mrf.mxu0
        %v370 = vadd.f32 %v314, %v369
        %371 = vmatmul.f32.gmra.mxu0 %v293
        %v372 = vpop.f32.mrf.mxu0
        %v373 = vadd.f32 %v314, %v372
        %374 = vmatmul.f32.gmra.mxu0 %v294
        %v375 = vpop.f32.mrf.mxu0
        %v376 = vadd.f32 %v314, %v375
        %377 = vmatmul.f32.gmra.mxu0 %v295
        %v378 = vpop.f32.mrf.mxu0
        %v379 = vadd.f32 %v314, %v378
        %380 = vdwg.mxu0
        %v381 = vmax.f32 %v334, 0.0
        %v382 = vmax.f32 %v337, 0.0
        %v383 = vmax.f32 %v340, 0.0
        %v384 = vmax.f32 %v343, 0.0
        %v385 = vmax.f32 %v346, 0.0
        %v386 = vmax.f32 %v349, 0.0
        %v387 = vmax.f32 %v352, 0.0
        %v388 = vmax.f32 %v355, 0.0
        %v389 = vmax.f32 %v358, 0.0
        %v390 = vmax.f32 %v361, 0.0
        %v391 = vmax.f32 %v364, 0.0
        %v392 = vmax.f32 %v367, 0.0
        %v393 = vmax.f32 %v370, 0.0
        %v394 = vmax.f32 %v373, 0.0
        %v395 = vmax.f32 %v376, 0.0
        %v396 = vmax.f32 %v379, 0.0
        %v397 = vld [vmem:[#allocation7] sm:$0xff]
        %v398 = vld [vmem:[#allocation7 + $0x8] sm:$0xff]
        %v399 = vld [vmem:[#allocation7 + $0x10] sm:$0xff]
        %v400 = vld [vmem:[#allocation7 + $0x18] sm:$0xff]
        %v401 = vld [vmem:[#allocation7 + $0x20] sm:$0xff]
        %v402 = vld [vmem:[#allocation7 + $0x28] sm:$0xff]
        %v403 = vld [vmem:[#allocation7 + $0x30] sm:$0xff]
        %v404 = vld [vmem:[#allocation7 + $0x38] sm:$0xff]
        %v405 = vld [vmem:[#allocation7 + $0x40] sm:$0xff]
        %v406 = vld [vmem:[#allocation7 + $0x48] sm:$0xff]
        %v407 = vld [vmem:[#allocation7 + $0x50] sm:$0xff]
        %v408 = vld [vmem:[#allocation7 + $0x58] sm:$0xff]
        %v409 = vld [vmem:[#allocation7 + $0x60] sm:$0xff]
        %v410 = vld [vmem:[#allocation7 + $0x68] sm:$0xff]
        %v411 = vld [vmem:[#allocation7 + $0x70] sm:$0xff]
        %v412 = vld [vmem:[#allocation7 + $0x78] sm:$0xff]
        %v413 = vld [vmem:[%s4] sm:$0x1]
        %v415 = vperm.slane %v413, 0
        %417 = vmatpush.msra.mxu0 %v412
        %418 = vmatpush.msra.mxu0 %v411
        %419 = vmatpush.msra.mxu0 %v410
        %420 = vmatpush.msra.mxu0 %v409
        %421 = vmatpush.msra.mxu0 %v408
        %422 = vmatpush.msra.mxu0 %v407
        %423 = vmatpush.msra.mxu0 %v406
        %424 = vmatpush.msra.mxu0 %v405
        %425 = vmatpush.msra.mxu0 %v404
        %426 = vmatpush.msra.mxu0 %v403
        %427 = vmatpush.msra.mxu0 %v402
        %428 = vmatpush.msra.mxu0 %v401
        %429 = vmatpush.msra.mxu0 %v400
        %430 = vmatpush.msra.mxu0 %v399
        %431 = vmatpush.msra.mxu0 %v398
        %432 = vmatpush.msra.mxu0 %v397
        %433 = vmatmul.f32.gmra.mxu0 %v381
        %v434 = vpop.f32.mrf.mxu0
        %v435 = vadd.f32 %v415, %v434
        %436 = vmatmul.f32.gmra.mxu0 %v382
        %v437 = vpop.f32.mrf.mxu0
        %v438 = vadd.f32 %v415, %v437
        %439 = vmatmul.f32.gmra.mxu0 %v383
        %v440 = vpop.f32.mrf.mxu0
        %v441 = vadd.f32 %v415, %v440
        %442 = vmatmul.f32.gmra.mxu0 %v384
        %v443 = vpop.f32.mrf.mxu0
        %v444 = vadd.f32 %v415, %v443
        %445 = vmatmul.f32.gmra.mxu0 %v385
        %v446 = vpop.f32.mrf.mxu0
        %v447 = vadd.f32 %v415, %v446
        %448 = vmatmul.f32.gmra.mxu0 %v386
        %v449 = vpop.f32.mrf.mxu0
        %v450 = vadd.f32 %v415, %v449
        %451 = vmatmul.f32.gmra.mxu0 %v387
        %v452 = vpop.f32.mrf.mxu0
        %v453 = vadd.f32 %v415, %v452
        %454 = vmatmul.f32.gmra.mxu0 %v388
        %v455 = vpop.f32.mrf.mxu0
        %v456 = vadd.f32 %v415, %v455
        %457 = vmatmul.f32.gmra.mxu0 %v389
        %v458 = vpop.f32.mrf.mxu0
        %v459 = vadd.f32 %v415, %v458
        %460 = vmatmul.f32.gmra.mxu0 %v390
        %v461 = vpop.f32.mrf.mxu0
        %v462 = vadd.f32 %v415, %v461
        %463 = vmatmul.f32.gmra.mxu0 %v391
        %v464 = vpop.f32.mrf.mxu0
        %v465 = vadd.f32 %v415, %v464
        %466 = vmatmul.f32.gmra.mxu0 %v392
        %v467 = vpop.f32.mrf.mxu0
        %v468 = vadd.f32 %v415, %v467
        %469 = vmatmul.f32.gmra.mxu0 %v393
        %v470 = vpop.f32.mrf.mxu0
        %v471 = vadd.f32 %v415, %v470
        %472 = vmatmul.f32.gmra.mxu0 %v394
        %v473 = vpop.f32.mrf.mxu0
        %v474 = vadd.f32 %v415, %v473
        %475 = vmatmul.f32.gmra.mxu0 %v395
        %v476 = vpop.f32.mrf.mxu0
        %v477 = vadd.f32 %v415, %v476
        %478 = vmatmul.f32.gmra.mxu0 %v396
        %v479 = vpop.f32.mrf.mxu0
        %v480 = vadd.f32 %v415, %v479
        %481 = vdwg.mxu0
        %482 = vst [vmem:[%s277] sm:$0xff] %v435
        %483 = vst [vmem:[%s277 + $0x8] sm:$0xff] %v438
        %484 = vst [vmem:[%s277 + $0x10] sm:$0xff] %v441
        %485 = vst [vmem:[%s277 + $0x18] sm:$0xff] %v444
        %486 = vst [vmem:[%s277 + $0x20] sm:$0xff] %v447
        %487 = vst [vmem:[%s277 + $0x28] sm:$0xff] %v450
        %488 = vst [vmem:[%s277 + $0x30] sm:$0xff] %v453
        %489 = vst [vmem:[%s277 + $0x38] sm:$0xff] %v456
        %490 = vst [vmem:[%s277 + $0x40] sm:$0xff] %v459
        %491 = vst [vmem:[%s277 + $0x48] sm:$0xff] %v462
        %492 = vst [vmem:[%s277 + $0x50] sm:$0xff] %v465
        %493 = vst [vmem:[%s277 + $0x58] sm:$0xff] %v468
        %494 = vst [vmem:[%s277 + $0x60] sm:$0xff] %v471
        %495 = vst [vmem:[%s277 + $0x68] sm:$0xff] %v474
        %496 = vst [vmem:[%s277 + $0x70] sm:$0xff] %v477
        %497 = vst [vmem:[%s277 + $0x78] sm:$0xff] %v480
        %s498 = sand.u32 %s141, 1
        %s499 = scalar_lea.sflag [#allocation4], %s498
        %s500 = sand.u32 %s141, 1
        %s501 = smul.addr %s500, 128
        %s502 = scalar_lea.vmem [#allocation8], %s501
        // Predicated region
        $region53: #{tpu_custom_call.1} parent=39 // pred_check
          %p503 = pneg %p151
        $region54: #{tpu_custom_call.1} parent=39 // pred_check_branch
          %505 = sbr.rel (%p503) target = $region56
        $region55: #{tpu_custom_call.1} parent=39 // pred_region
          %s506 = smul.u32 16, %s23
          %508 = vsyncadd %s499, 0
          %s509 = smul.addr %s506, 8
          %s510 = scalar_lea.hbm %s5, %s509
          %s511 = sshll.u32 %s502, 4
          %s512 = int_to_ptr.vmem [resolvable:$true] %s511
          %s513 = sshll.u32 %s510, 4
          %s514 = int_to_ptr.hbm [resolvable:$true] %s513
          %519 = dma.vmem_to_hbm [thread:$0]  %s512, 2048, %s514, %s499, 128, 128, 8
        $region56: #{tpu_custom_call.1} parent=39 // pred_fallthru
          _
      $region40: #{tpu_custom_call.1} parent=5 // pred_fallthru
        _
      %p520 = scmp.le.s32.totalorder 2, %s18
      // Predicated region
      $region57: #{tpu_custom_call.1} parent=5 // pred_check
        %p521 = pneg %p520
      $region58: #{tpu_custom_call.1} parent=5 // pred_check_branch
        %523 = sbr.rel (%p521) target = $region60
      $region59: #{tpu_custom_call.1} parent=5 // pred_region
        %s524 = ssub.s32 %s18, 2
        // Predicated region
        $region61: #{tpu_custom_call.1} parent=59 // pred_check
          %p525 = pneg %p157
        $region62: #{tpu_custom_call.1} parent=59 // pred_check_branch
          %527 = sbr.rel (%p525) target = $region64
        $region63: #{tpu_custom_call.1} parent=59 // pred_region
          %s528 = sand.u32 %s142, 1
          %s529 = scalar_lea.sflag [#allocation4], %s528
          %s530 = sand.u32 %s142, 1
          %s531 = smul.addr %s530, 128
          %s532 = scalar_lea.vmem [#allocation8], %s531
          %534 = dma.done %s529, 2048
        $region64: #{tpu_custom_call.1} parent=59 // pred_fallthru
          _
      $region60: #{tpu_custom_call.1} parent=5 // pred_fallthru
        _
    $region6: #{tpu_custom_call.1} parent=1 // loop_footer
      %s22 = sadd.s32 1, %s18
    $region7: #{tpu_custom_call.1} parent=1 // loop_footer_branch
      %17 = sbr.rel target = $region3
    $region8: #{tpu_custom_call.1} parent=1 // loop_exit
      _
    %535 = vsyncpa [#allocation3], 1
    %s536 = scalar_lea.sflag [#allocation3], 1
    %537 = vsyncpa %s536, 1
    %538 = vsyncpa [#allocation6], 1
    %539 = vsyncpa [#allocation4], 1
    %s540 = scalar_lea.sflag [#allocation4], 1
    %541 = vsyncpa %s540, 1

</llo_original>
